<compile_context>
chip_gen: v5e
topology: v5e:2x2
jax: 0.10.0
libtpu: 0.0.40
codegen_flags: <defaults>
</compile_context>

<pallas_src>
import functools

import jax
import jax.numpy as jnp
from jax import lax
from jax.experimental import pallas as pl
from jax.experimental.pallas import tpu as pltpu


# ------------------------------ tiling helpers ------------------------------ #

def _round_up(x, m):
    return (x + m - 1) // m * m


def _vmem_budget():
    """Generation-aware (tile budget, mosaic scoped-VMEM limit) in bytes."""
    phys = 64 << 20  # conservative default = v7x per-TC VMEM
    try:
        info = pltpu.get_tpu_info()
        cap = getattr(info, "vmem_capacity_bytes", None)
        if cap:
            phys = int(cap)
    except Exception:
        pass
    tile_budget = min(max(phys // 3, 12 << 20), 48 << 20)   # v6e/v5e ~42M, v7x ~21M
    vmem_limit = min(int(phys * 3 // 4), 100 << 20)          # v6e/v5e 96M, v7x 48M
    return tile_budget, vmem_limit


def _choose_tiles(M, Kc, Nf_pad, out_bytes, budget_bytes, min_steps=8):
    # Lane-dense output tile (multiple of 128).
    tn = 128
    for cand in (512, 384, 256, 128):
        if Nf_pad % cand == 0:
            tn = cand
            break
    tn = min(tn, Nf_pad)
    grid_n = Nf_pad // tn

    # tm: multiple of 16 (bf16 sublane packing), VMEM-budget aware, and small
    # enough that the parallel grid has >= min_steps steps (keeps both v7x
    # TensorCores busy and lets double-buffering overlap DMA with compute).
    m_cap = max(_round_up(M, 16), 16)
    tm = 16
    for cand in (1024, 512, 256, 128, 64, 32, 16):
        if cand > m_cap:
            continue
        need = (2 * (cand * Kc * 2 + Kc * tn * 2 + cand * tn * out_bytes)
                + 2 * tn * 4)
        if need > budget_bytes:
            continue
        if pl.cdiv(M, cand) * grid_n >= min_steps or cand == 16:
            tm = cand
            break
    return tm, tn


# ------------------------------ Pallas kernel ------------------------------- #

def _matmul_bias_kernel(a_ref, w_ref, b_ref, o_ref):
    # (tm, Kc)bf16 @ (Kc, tn)bf16 -> f32 accumulation, fused bias epilogue.
    acc = jnp.dot(a_ref[...], w_ref[...], preferred_element_type=jnp.float32)
    o_ref[...] = (acc + b_ref[...]).astype(o_ref.dtype)


def _pallas_matmul_bias(a, w, bias_row, out_dtype):
    """(M, Kc) @ (Kc, Nf_pad) + bias_row (1, Nf_pad) -> (M, Nf_pad)."""
    M, Kc = a.shape
    Nf_pad = w.shape[1]
    out_bytes = jnp.dtype(out_dtype).itemsize
    budget, vmem_limit = _vmem_budget()
    tm, tn = _choose_tiles(M, Kc, Nf_pad, out_bytes, budget)
    grid_m = pl.cdiv(M, tm)          # ragged last block: OOB stores are masked
    grid_n = Nf_pad // tn

    # Grid order: weight (N) axis OUTERMOST, M innermost -> the (Kc, tn)
    # weight block index is constant across the inner loop (weight-stationary,
    # fetched once per column tile); A / output are the only per-step streams.
    return pl.pallas_call(
        _matmul_bias_kernel,
        out_shape=jax.ShapeDtypeStruct((M, Nf_pad), out_dtype),
        grid=(grid_n, grid_m),
        in_specs=[
            pl.BlockSpec((tm, Kc), lambda j, i: (i, 0)),
            pl.BlockSpec((Kc, tn), lambda j, i: (0, j)),
            pl.BlockSpec((1, tn), lambda j, i: (0, j)),
        ],
        out_specs=pl.BlockSpec((tm, tn), lambda j, i: (i, j)),
        compiler_params=pltpu.CompilerParams(
            dimension_semantics=("parallel", "parallel"),
            vmem_limit_bytes=vmem_limit),
    )(a, w, bias_row)


# ------------------------------- forward ------------------------------------ #

def monkeypatch_lora_convtranspose2d(x, w_main, b_main, w_down, w_up,
                                     lora_scale, *, stride, padding,
                                     output_padding):
    """x: (N, Cin, H, W). Returns (N, Cout, Hout, Wout) in x.dtype."""
    orig_dtype = x.dtype
    N, Cin, H, W = x.shape
    _, Cout, K, _ = w_main.shape
    R = w_down.shape[0]
    s = stride
    Hout = (H - 1) * s - 2 * padding + K + output_padding
    Wout = (W - 1) * s - 2 * padding + K + output_padding

    # ---- fold the LoRA branch into the main weight (everything is linear) ----
    w_lora = jnp.einsum('rc,rokl->cokl',
                        w_down.reshape(R, Cin).astype(jnp.float32),
                        w_up.astype(jnp.float32))
    w_eff = w_main.astype(jnp.float32) + jnp.asarray(lora_scale, jnp.float32) * w_lora

    # ---- phase (sub-pixel) decomposition of the transposed convolution ----
    # canvas[q*s + ph] gets only taps kh = ph + s*t  => per-phase writes never
    # overlap.  Pad the kernel with zero taps so every phase has T taps and the
    # padded canvas covers [padding, padding + Hout).
    T = -(-(K + max(0, output_padding - padding)) // s)     # ceil
    K_pad = s * T
    w_pad = jnp.pad(w_eff, ((0, 0), (0, 0), (0, K_pad - K), (0, K_pad - K)))
    # (c, co, t_h, ph_h, t_w, ph_w) -> rows (t_h, t_w, c), cols (ph_h, ph_w, co)
    w_mat = (w_pad.reshape(Cin, Cout, T, s, T, s)
             .transpose(2, 4, 0, 3, 5, 1)
             .reshape(T * T * Cin, s * s * Cout))

    # ---- input-side im2col over the small T x T tap window (bf16, built once)
    # A[n, qh, qw, (th, tw, c)] = x[n, c, qh - th, qw - tw]   (zero outside)
    # TODO(synk): the tap gather and the final depth-to-space transpose stay in
    # XLA; overlapping halo windows have no clean BlockSpec expression.
    x_nhwc = x.transpose(0, 2, 3, 1).astype(jnp.bfloat16)
    hp = T - 1
    x_sp = jnp.pad(x_nhwc, ((0, 0), (hp, hp), (hp, hp), (0, 0)))
    Hq, Wq = H - 1 + T, W - 1 + T
    slabs = [x_sp[:, hp - th:hp - th + Hq, hp - tw:hp - tw + Wq, :]
             for th in range(T) for tw in range(T)]
    a = jnp.stack(slabs, axis=3).reshape(N * Hq * Wq, T * T * Cin)

    # ---- lane-dense padded weight / bias row, one Pallas matmul ----
    Nf = s * s * Cout
    Nf_pad = _round_up(Nf, 128)
    w_mat = jnp.pad(w_mat.astype(jnp.bfloat16), ((0, 0), (0, Nf_pad - Nf)))
    bias = (jnp.zeros((Cout,), jnp.float32) if b_main is None
            else b_main.astype(jnp.float32))
    bias_row = jnp.pad(jnp.tile(bias, s * s), (0, Nf_pad - Nf)).reshape(1, Nf_pad)

    c = _pallas_matmul_bias(a, w_mat, bias_row, orig_dtype)   # (M, Nf_pad)

    # ---- depth-to-space (phases never overlap), crop, NCHW ----
    c = c[:, :Nf].reshape(N, Hq, Wq, s, s, Cout)
    canvas = c.transpose(0, 1, 3, 2, 4, 5).reshape(N, Hq * s, Wq * s, Cout)
    out = canvas[:, padding:padding + Hout, padding:padding + Wout, :]
    return out.transpose(0, 3, 1, 2).astype(orig_dtype)


# ------------------------------- reference ---------------------------------- #

def _ref_convtrans(x, w_t, stride, padding, output_padding):
    K = w_t.shape[2]
    w_conv = jnp.flip(w_t, axis=(2, 3)).transpose(1, 0, 2, 3)  # (Cout, Cin, K, K)
    pad = (K - 1 - padding, K - 1 - padding + output_padding)
    return lax.conv_general_dilated(
        x, w_conv, window_strides=(1, 1), padding=[pad, pad],
        lhs_dilation=(stride, stride),
        dimension_numbers=('NCHW', 'OIHW', 'NCHW'),
        precision=lax.Precision.HIGHEST)


def _ref_forward(x, w_main, b_main, w_down, w_up, stride, padding,
                 output_padding, scale):
    main = _ref_convtrans(x, w_main, stride, padding, output_padding)
    main = main + b_main[None, :, None, None]
    down = jnp.einsum('nchw,rc->nrhw', x, w_down.reshape(w_down.shape[0], -1),
                      precision=lax.Precision.HIGHEST)
    up = _ref_convtrans(down, w_up, stride, padding, output_padding)
    return main + scale * up


# --------------------------------- main -------------------------------------- #

if __name__ == "__main__":
    N, H, W = 2, 16, 16
    rank, lora_scale = 4, 0.5
    # (Cin, Cout, K, stride, padding, output_padding) — second/third configs
    # exercise zero-padded taps (K not multiple of stride) and output_padding.
    configs = [(4, 8, 4, 2, 1, 0),
               (4, 8, 3, 2, 1, 1),
               (4, 8, 4, 2, 0, 1)]

    key = jax.random.PRNGKey(0)
    for (Cin, Cout, K, s, p, op) in configs:
        key, k0, k1, k2, k3, k4 = jax.random.split(key, 6)
        x = jax.random.normal(k0, (N, Cin, H, W), jnp.float32)
        # Parameter shapes from __init__:
        #   convtrans.weight (Cin, Cout, K, K), convtrans.bias (Cout,)
        #   lora.down.weight (rank, Cin, 1, 1) (std = 1/rank)
        #   lora.up.weight (rank, Cout, K, K) (module inits zeros; use small
        #   random values so the LoRA path is actually exercised)
        w_main = 0.1 * jax.random.normal(k1, (Cin, Cout, K, K), jnp.float32)
        b_main = 0.1 * jax.random.normal(k2, (Cout,), jnp.float32)
        w_down = (1.0 / rank) * jax.random.normal(k3, (rank, Cin, 1, 1), jnp.float32)
        w_up = 0.05 * jax.random.normal(k4, (rank, Cout, K, K), jnp.float32)

        fwd = jax.jit(functools.partial(
            monkeypatch_lora_convtranspose2d,
            stride=s, padding=p, output_padding=op))
        out = jax.block_until_ready(fwd(x, w_main, b_main, w_down, w_up, lora_scale))
        ref = jax.block_until_ready(_ref_forward(
            x, w_main, b_main, w_down, w_up, s, p, op, lora_scale))

        assert out.shape == ref.shape, (out.shape, ref.shape)
        err = float(jnp.max(jnp.abs(out - ref)))
        assert jnp.allclose(out, ref, rtol=2e-2, atol=2e-2), \
            f"config {(Cin, Cout, K, s, p, op)}: max abs err = {err}"

    print("KERNEL_OK")
</pallas_src>

<mosaic_0001>
module attributes {stable_mosaic.version = 11 : i64} {
  func.func @_matmul_bias_kernel(%arg0: i32, %arg1: i32, %arg2: memref<64x16xbf16, #tpu.memory_space<vmem>>, %arg3: memref<16x128xbf16, #tpu.memory_space<vmem>>, %arg4: memref<1x128xf32, #tpu.memory_space<vmem>>, %arg5: memref<64x128xf32, #tpu.memory_space<vmem>>) attributes {dimension_semantics = [#tpu.dimension_semantics<parallel>, #tpu.dimension_semantics<parallel>], iteration_bounds = array<i64: 1, 10>, scalar_prefetch = 0 : i64, scratch_operands = 0 : i64, tpu.core_type = #tpu.core_type<tc>, window_params = [{transform_indices = @transform_0, window_bounds = array<i64: 64, 16>}, {transform_indices = @transform_1, window_bounds = array<i64: 16, 128>}, {transform_indices = @transform_2, window_bounds = array<i64: 1, 128>}, {transform_indices = @transform_3, window_bounds = array<i64: 64, 128>}]} {
    %c0 = arith.constant 0 : index
    %c0_0 = arith.constant 0 : index
    %0 = vector.load %arg2[%c0, %c0_0] : memref<64x16xbf16, #tpu.memory_space<vmem>>, vector<64x16xbf16>
    %c0_1 = arith.constant 0 : index
    %c0_2 = arith.constant 0 : index
    %1 = vector.load %arg3[%c0_1, %c0_2] : memref<16x128xbf16, #tpu.memory_space<vmem>>, vector<16x128xbf16>
    %cst = arith.constant dense<0.000000e+00> : vector<64x128xf32>
    %2 = tpu.matmul %0, %1, %cst {dimension_numbers = #tpu.dot_dimension_numbers<[1], [0], [0], [1], [0, 0, 1, 1], [], []>} : vector<64x16xbf16>, vector<16x128xbf16>, vector<64x128xf32> -> vector<64x128xf32>
    %c0_3 = arith.constant 0 : index
    %c0_4 = arith.constant 0 : index
    %3 = vector.load %arg4[%c0_3, %c0_4] : memref<1x128xf32, #tpu.memory_space<vmem>>, vector<1x128xf32>
    %4 = vector.broadcast %3 : vector<1x128xf32> to vector<64x128xf32>
    %5 = arith.addf %2, %4 : vector<64x128xf32>
    %c0_5 = arith.constant 0 : index
    %c0_6 = arith.constant 0 : index
    %6 = vector.load %arg5[%c0_5, %c0_6] : memref<64x128xf32, #tpu.memory_space<vmem>>, vector<64x128xf32>
    tpu.vector_store %arg5[%c0_5, %c0_6], %5 {strides = array<i32>} : memref<64x128xf32, #tpu.memory_space<vmem>>, vector<64x128xf32>,
    return
  }
  func.func @transform_0(%arg0: i32, %arg1: i32) -> (i32, i32) {
    %c0_i32 = arith.constant 0 : i32
    %c0_i32_0 = arith.constant 0 : i32
    return %arg1, %c0_i32 : i32, i32
  }
  func.func @transform_1(%arg0: i32, %arg1: i32) -> (i32, i32) {
    %c0_i32 = arith.constant 0 : i32
    %c0_i32_0 = arith.constant 0 : i32
    return %c0_i32, %arg0 : i32, i32
  }
  func.func @transform_2(%arg0: i32, %arg1: i32) -> (i32, i32) {
    %c0_i32 = arith.constant 0 : i32
    %c0_i32_0 = arith.constant 0 : i32
    return %c0_i32, %arg0 : i32, i32
  }
  func.func @transform_3(%arg0: i32, %arg1: i32) -> (i32, i32) {
    %c0_i32 = arith.constant 0 : i32
    return %arg1, %arg0 : i32, i32
  }
}

</mosaic_0001>

<llo_original>
// kernel: tile.8
$region0: #{tile.8}
  #allocation2 [shape = 's32[1]{0}', space=sflag, size = 0x4, scoped, tag = 'scoped memory for tile.8']
  %s0 = inlined_call_operand.hbm [shape: f32[8], index: 0, kind: input, shape index: {}]
  %s1 = inlined_call_operand.vmem [shape: f32[4,8], index: 1, kind: output, shape index: {}]
  $region1: #{tile.8} parent=0
    #allocation0 [shape = 'u8[512]{0}', space=vmem, size = 0x400, scoped, tag = 'operand span for operand 0']
    #allocation1 [shape = 's32[1]{0}', space=sflag, size = 0x4, scoped, tag = 'scoped memory for tile.8']
    %2 = vsyncpa [#allocation1], 0
    // Predicated region
    $region2: #{tile.8} parent=1 // pred_check
      _
    $region3: #{tile.8} parent=1 // pred_check_branch
      %4 = sbr.rel (0) target = $region5
    $region4: #{tile.8} parent=1 // pred_region
      %6 = vsyncadd [#allocation1], 0
      %s8 = sshll.u32 %s0, 4
      %s9 = int_to_ptr.hbm [resolvable:$true] %s8
      %s10 = sshll.u32 [#allocation0], 4
      %s11 = int_to_ptr.vmem [resolvable:$true] %s10
      %13 = dma.hbm_to_vmem [thread:$0]  %s9, 16, %s11, [#allocation1]
    $region5: #{tile.8} parent=1 // pred_fallthru
      _
    // Predicated region
    $region6: #{tile.8} parent=1 // pred_check
      _
    $region7: #{tile.8} parent=1 // pred_check_branch
      %15 = sbr.rel (0) target = $region9
    $region8: #{tile.8} parent=1 // pred_region
      %17 = dma.done [#allocation1], 16
    $region9: #{tile.8} parent=1 // pred_fallthru
      _
    %v18 = vld [vmem:[#allocation0] ss:$0 sm:$0xff]
    %19 = vst [vmem:[%s1] sm:$0xf] %v18
    %20 = vsyncpa [#allocation1], 1

// kernel: tile.9
$region0: #{tile.9}
  %s0 = inlined_call_operand.vmem [shape: f32[4,8], index: 0, kind: input, shape index: {}]
  %s1 = inlined_call_operand.vmem [shape: f32[32], index: 1, kind: output, shape index: {}]
  $region1: #{tile.9} parent=0
    #allocation0 [shape = 'u8[4096]{0}', space=vmem, size = 0x1000, scoped, tag = 'scoped mem for output reshape']
    #allocation1 [shape = 'u8[4096]{0}', space=vmem, size = 0x1000, scoped, tag = 'scoped mem for input reshape']
    %s3 = ssub.s32 16, 1
    %v4 = vld [vmem:[%s0] sm:%s3]
    %5 = vst [vmem:[#allocation1] sm:%s3] %v4
    %v6 = vld [vmem:[#allocation1] sm:$0x1]
    %vm7 = vcmask 64512
    %8 = vst.msk [vmem:[#allocation0] sm:$0x1] %vm7, %v6
    %s9 = scalar_lea.vmem [#allocation1], 3
    %v10 = vld [vmem:[%s9] sm:$0x1]
    %11 = vrot.lane.b32.xlu0 %v10, 24
    %v12 = vpop.permute.xlu0 %11
    %vm13 = vcmask 261312
    %14 = vst.msk [vmem:[#allocation0] sm:$0x1] %vm13, %v12
    %s15 = scalar_lea.vmem [#allocation1], 2
    %v16 = vld [vmem:[%s15] sm:$0x1]
    %17 = vrot.lane.b32.xlu0 %v16, 16
    %v18 = vpop.permute.xlu0 %17
    %vm19 = vcmask 195712
    %20 = vst.msk [vmem:[#allocation0] sm:$0x1] %vm19, %v18
    %s21 = scalar_lea.vmem [#allocation1], 1
    %v22 = vld [vmem:[%s21] sm:$0x1]
    %23 = vrot.lane.b32.xlu0 %v22, 8
    %v24 = vpop.permute.xlu0 %23
    %vm25 = vcmask 130112
    %26 = vst.msk [vmem:[#allocation0] sm:$0x1] %vm25, %v24
    %s28 = ssub.s32 2, 1
    %v29 = vld [vmem:[#allocation0] sm:%s28]
    %s31 = ssub.s32 2, 1
    %32 = vst [vmem:[%s1] sm:%s31] %v29

// kernel: monkeypatch_lora_convtranspose2d.1
$region0: #{monkeypatch_lora_convtranspose2d.1}
  #allocation0 [shape = 'u32[]', space=smem, size = 0x4, offset = 0x4, fixed_abs, tag = 'smem constant byte address 0x4 - core index']
  #allocation1 [shape = 'u32[72,128]{1,0:T(1,128)}', space=vmem, size = 0x9000, scoped, tag = 'internal scratch']
  %s0 = inlined_call_operand.vmem [shape: bf16[578,16], index: 0, kind: input, shape index: {}]
  %s1 = inlined_call_operand.vmem [shape: bf16[16,128], index: 1, kind: input, shape index: {}]
  %s2 = inlined_call_operand.vmem [shape: f32[1,128], index: 2, kind: input, shape index: {}]
  %s3 = inlined_call_operand.vmem [shape: f32[578,128], index: 3, kind: output, shape index: {}]
  %s4 = sld [smem:[#allocation0]]
  $region93: #{monkeypatch_lora_convtranspose2d.1} parent=0
    _
  %s6 = ssub.s32 1, %s4
  %s7 = scalar_select 0, %s6, %s4
  $region1: #{monkeypatch_lora_convtranspose2d.1} parent=0
    #allocation2 [shape = 'u8[65536]{0}', space=vmem, size = 0x10000, scoped, tag = 'output window, operand 0']
    loop: start=0, step=1, limit=12
    $region2: #{monkeypatch_lora_convtranspose2d.1} parent=1 // loop_pre_header
      _
    $region3: #{monkeypatch_lora_convtranspose2d.1} parent=1 // loop_header
      %s9 = sphi 0, %s13
      %p10 = scmp.ge.s32.totalorder %s9, 12
      %s16 = sphi 0, %s28
      %s17 = sphi 0, %s24
      %s18 = sphi 0, %s16
      %s19 = sphi 0, %s17
      %s20 = sphi 0, %s18
      %s21 = sphi 0, %s19
      %s31 = sphi 0, %s33
      %s34 = sphi 0, %s31
      %s35 = sphi 0, %s34
      %s51 = sphi 0, %s35
      %s57 = sphi 0, %s59
      %s60 = sphi 0, %s57
      %s61 = sphi 0, %s60
      %s77 = sphi 0, %s61
      %s83 = sphi 0, %s85
      %s86 = sphi 0, %s83
      %s87 = sphi 0, %s86
      %s103 = sphi 0, %s87
      %s111 = sphi 0, %s113
      %s114 = sphi 0, %s111
      %s115 = sphi 0, %s114
      %s131 = sphi 0, %s115
    $region4: #{monkeypatch_lora_convtranspose2d.1} parent=1 // loop_header_branch
      %12 = sbr.rel (%p10) target = $region8
    $region5: #{monkeypatch_lora_convtranspose2d.1} parent=1 // loop_body
      %s14 = ssub.s32 %s9, 1
      %s15 = ssub.s32 %s9, 2
      %s22 = sadd.s32 1, %s17
      %p23 = scmp.ge.s32.totalorder %s22, 10
      %s24 = scalar_select %p23, 0, %s22
      %s25 = sadd.s32 1, %s16
      %s26 = scalar_select %p23, %s25, %s16
      %p27 = scmp.ge.s32.totalorder %s26, 1
      %s28 = scalar_select %p27, 0, %s26
      %s29 = ssub.s32 %s17, %s24
      %p30 = scmp.eq.s32.totalorder %s29, 0
      %s32 = sadd.s32 %s31, 1
      %s33 = scalar_select %p30, %s31, %s32
      %p36 = pneg %p30
      %p37 = scmp.eq.s32.totalorder %s9, 9
      %p38 = por %p36, %p37
      %p39 = scmp.ne.s32.totalorder %s31, %s34
      %p40 = scmp.eq.s32.totalorder %s9, 0
      %p41 = por %p39, %p40
      %p42 = scmp.ne.s32.totalorder %s31, %s34
      %p43 = scmp.eq.s32.totalorder %s14, 9
      %p44 = por %p42, %p43
      %p45 = scmp.ne.s32.totalorder %s34, %s35
      %p46 = scmp.eq.s32.totalorder %s14, 0
      %p47 = por %p45, %p46
      %p48 = scmp.ne.s32.totalorder %s34, %s35
      %p49 = scmp.eq.s32.totalorder %s15, 9
      %p50 = por %p48, %p49
      %p52 = scmp.ne.s32.totalorder %s35, %s51
      %p53 = scmp.eq.s32.totalorder %s15, 0
      %p54 = por %p52, %p53
      %s55 = ssub.s32 %s16, %s28
      %p56 = scmp.eq.s32.totalorder %s55, 0
      %s58 = sadd.s32 %s57, 1
      %s59 = scalar_select %p56, %s57, %s58
      %p62 = pneg %p56
      %p63 = scmp.eq.s32.totalorder %s9, 9
      %p64 = por %p62, %p63
      %p65 = scmp.ne.s32.totalorder %s57, %s60
      %p66 = scmp.eq.s32.totalorder %s9, 0
      %p67 = por %p65, %p66
      %p68 = scmp.ne.s32.totalorder %s57, %s60
      %p69 = scmp.eq.s32.totalorder %s14, 9
      %p70 = por %p68, %p69
      %p71 = scmp.ne.s32.totalorder %s60, %s61
      %p72 = scmp.eq.s32.totalorder %s14, 0
      %p73 = por %p71, %p72
      %p74 = scmp.ne.s32.totalorder %s60, %s61
      %p75 = scmp.eq.s32.totalorder %s15, 9
      %p76 = por %p74, %p75
      %p78 = scmp.ne.s32.totalorder %s61, %s77
      %p79 = scmp.eq.s32.totalorder %s15, 0
      %p80 = por %p78, %p79
      %s81 = ssub.s32 %s16, %s28
      %p82 = scmp.eq.s32.totalorder %s81, 0
      %s84 = sadd.s32 %s83, 1
      %s85 = scalar_select %p82, %s83, %s84
      %p88 = pneg %p82
      %p89 = scmp.eq.s32.totalorder %s9, 9
      %p90 = por %p88, %p89
      %p91 = scmp.ne.s32.totalorder %s83, %s86
      %p92 = scmp.eq.s32.totalorder %s9, 0
      %p93 = por %p91, %p92
      %p94 = scmp.ne.s32.totalorder %s83, %s86
      %p95 = scmp.eq.s32.totalorder %s14, 9
      %p96 = por %p94, %p95
      %p97 = scmp.ne.s32.totalorder %s86, %s87
      %p98 = scmp.eq.s32.totalorder %s14, 0
      %p99 = por %p97, %p98
      %p100 = scmp.ne.s32.totalorder %s86, %s87
      %p101 = scmp.eq.s32.totalorder %s15, 9
      %p102 = por %p100, %p101
      %p104 = scmp.ne.s32.totalorder %s87, %s103
      %p105 = scmp.eq.s32.totalorder %s15, 0
      %p106 = por %p104, %p105
      %s107 = ssub.s32 %s17, %s24
      %s108 = ssub.s32 %s16, %s28
      %s109 = sor.u32 %s107, %s108
      %p110 = scmp.eq.s32.totalorder %s109, 0
      %s112 = sadd.s32 %s111, 1
      %s113 = scalar_select %p110, %s111, %s112
      %p116 = pneg %p110
      %p117 = scmp.eq.s32.totalorder %s9, 9
      %p118 = por %p116, %p117
      %p119 = scmp.ne.s32.totalorder %s111, %s114
      %p120 = scmp.eq.s32.totalorder %s9, 0
      %p121 = por %p119, %p120
      %p122 = scmp.ne.s32.totalorder %s111, %s114
      %p123 = scmp.eq.s32.totalorder %s14, 9
      %p124 = por %p122, %p123
      %p125 = scmp.ne.s32.totalorder %s114, %s115
      %p126 = scmp.eq.s32.totalorder %s14, 0
      %p127 = por %p125, %p126
      %p128 = scmp.ne.s32.totalorder %s114, %s115
      %p129 = scmp.eq.s32.totalorder %s15, 9
      %p130 = por %p128, %p129
      %p132 = scmp.ne.s32.totalorder %s115, %s131
      %p133 = scmp.eq.s32.totalorder %s15, 0
      %p134 = por %p132, %p133
      %p135 = scmp.le.s32.totalorder 1, %s9
      %p136 = scmp.lt.s32.totalorder %s9, 11
      %p137 = pnand %p135, %p136
      %p138 = pneg %p137
      // Predicated region
      $region9: #{monkeypatch_lora_convtranspose2d.1} parent=5 // pred_check
        _
      $region10: #{monkeypatch_lora_convtranspose2d.1} parent=5 // pred_check_branch
        %140 = sbr.rel (%p137) target = $region12
      $region11: #{monkeypatch_lora_convtranspose2d.1} parent=5 // pred_region
        %s141 = ssub.s32 %s9, 1
        // Predicated region
        $region13: #{monkeypatch_lora_convtranspose2d.1} parent=11 // pred_check
          %p142 = pneg %p73
        $region14: #{monkeypatch_lora_convtranspose2d.1} parent=11 // pred_check_branch
          %144 = sbr.rel (%p142) target = $region16
        $region15: #{monkeypatch_lora_convtranspose2d.1} parent=11 // pred_region
          %p145 = scmp.lt.s32.totalorder %s18, 0
          %s146 = scalar_select %p145, %s18, 0
          %s147 = smul.addr %s146, 4
          %s148 = scalar_lea.vmem %s1, %s147
        $region16: #{monkeypatch_lora_convtranspose2d.1} parent=11 // pred_fallthru
          _
        // Predicated region
        $region17: #{monkeypatch_lora_convtranspose2d.1} parent=11 // pred_check
          %p149 = pneg %p99
        $region18: #{monkeypatch_lora_convtranspose2d.1} parent=11 // pred_check_branch
          %151 = sbr.rel (%p149) target = $region20
        $region19: #{monkeypatch_lora_convtranspose2d.1} parent=11 // pred_region
          %p152 = scmp.lt.s32.totalorder %s18, 0
          %s153 = scalar_select %p152, %s18, 0
          %s154 = scalar_lea.vmem %s2, %s153
        $region20: #{monkeypatch_lora_convtranspose2d.1} parent=11 // pred_fallthru
          _
      $region12: #{monkeypatch_lora_convtranspose2d.1} parent=5 // pred_fallthru
        _
      %p155 = scmp.lt.s32.totalorder %s9, 10
      // Predicated region
      $region21: #{monkeypatch_lora_convtranspose2d.1} parent=5 // pred_check
        %p156 = pneg %p155
      $region22: #{monkeypatch_lora_convtranspose2d.1} parent=5 // pred_check_branch
        %158 = sbr.rel (%p156) target = $region24
      $region23: #{monkeypatch_lora_convtranspose2d.1} parent=5 // pred_region
        // Predicated region
        $region25: #{monkeypatch_lora_convtranspose2d.1} parent=23 // pred_check
          %p159 = pneg %p41
        $region26: #{monkeypatch_lora_convtranspose2d.1} parent=23 // pred_check_branch
          %161 = sbr.rel (%p159) target = $region28
        $region27: #{monkeypatch_lora_convtranspose2d.1} parent=23 // pred_region
          %s162 = smul.u32 8, %s17
          %s163 = ssub.s32 73, %s162
          %p164 = scmp.lt.s32.totalorder %s163, 8
          %s165 = scalar_select %p164, %s163, 8
          %s166 = smul.u32 4, %s165
          %p167 = scmp.lt.s32.totalorder %s162, 72
          %s168 = scalar_select %p167, %s162, 72
          %s169 = smul.addr %s168, 4
          %s170 = scalar_lea.vmem %s0, %s169
          %s171 = smul.u32 8, %s17
          %s172 = ssub.s32 73, %s171
          %p173 = scmp.lt.s32.totalorder %s172, 8
          %s174 = scalar_select %p173, %s172, 8
          %s175 = smul.u32 4, %s174
        $region28: #{monkeypatch_lora_convtranspose2d.1} parent=23 // pred_fallthru
          _
      $region24: #{monkeypatch_lora_convtranspose2d.1} parent=5 // pred_fallthru
        _
      %p176 = scmp.le.s32.totalorder 1, %s9
      %p177 = scmp.lt.s32.totalorder %s9, 11
      %p178 = pnand %p176, %p177
      %p179 = pneg %p178
      // Predicated region
      $region29: #{monkeypatch_lora_convtranspose2d.1} parent=5 // pred_check
        _
      $region30: #{monkeypatch_lora_convtranspose2d.1} parent=5 // pred_check_branch
        %181 = sbr.rel (%p178) target = $region32
      $region31: #{monkeypatch_lora_convtranspose2d.1} parent=5 // pred_region
        %s182 = ssub.s32 %s9, 1
        %s183 = smul.u32 8, %s19
        %s184 = ssub.s32 73, %s183
        %p185 = scmp.lt.s32.totalorder %s184, 8
        %s186 = scalar_select %p185, %s184, 8
        %s187 = smul.u32 4, %s186
        %p188 = scmp.lt.s32.totalorder %s183, 72
        %s189 = scalar_select %p188, %s183, 72
        %s190 = smul.addr %s189, 4
        %s191 = scalar_lea.vmem %s0, %s190
        %p192 = pneg %p47
        %p193 = pneg %p44
        %p194 = scmp.lt.s32.totalorder %s18, 0
        %s195 = scalar_select %p194, %s18, 0
        %s196 = smul.addr %s195, 4
        %s197 = scalar_lea.vmem %s1, %s196
        %p198 = pneg %p73
        %p199 = pneg %p70
        %p200 = scmp.lt.s32.totalorder %s18, 0
        %s201 = scalar_select %p200, %s18, 0
        %s202 = scalar_lea.vmem %s2, %s201
        %p203 = pneg %p99
        %p204 = pneg %p96
        %p205 = pneg %p127
        %p206 = pneg %p124
        %s207 = sand.u32 %s114, 1
        %s208 = sand.u32 %s114, 1
        %s209 = smul.addr %s208, 64
        %s210 = scalar_lea.vmem [#allocation2], %s209
        %s211 = smul.u32 8, %s19
        %s212 = ssub.s32 73, %s211
        %p213 = scmp.lt.s32.totalorder %s212, 8
        %s214 = scalar_select %p213, %s212, 8
        %s215 = smul.u32 4, %s214
        %p216 = scmp.lt.s32.totalorder %s211, 72
        %s217 = scalar_select %p216, %s211, 72
        %s218 = smul.addr %s217, 4
        %s219 = scalar_lea.vmem %s0, %s218
        %s220 = smul.u32 8, %s19
        %s221 = ssub.s32 73, %s220
        %p222 = scmp.lt.s32.totalorder %s221, 8
        %s223 = scalar_select %p222, %s221, 8
        %s224 = smul.u32 4, %s223
        %p225 = scmp.lt.s32.totalorder %s18, 0
        %s226 = scalar_select %p225, %s18, 0
        %s227 = smul.addr %s226, 4
        %s228 = scalar_lea.vmem %s1, %s227
        %p229 = scmp.lt.s32.totalorder %s18, 0
        %s230 = scalar_select %p229, %s18, 0
        %s231 = scalar_lea.vmem %s2, %s230
        %s232 = smul.u32 8, %s19
        %s233 = ssub.s32 73, %s232
        %p234 = scmp.lt.s32.totalorder %s233, 8
        %s235 = scalar_select %p234, %s233, 8
        %s236 = smul.u32 8, %s235
        %v238 = vld [vmem:[%s219] sm:$0xf]
        %v239 = vld [vmem:[%s219 + $0x4] sm:$0xf]
        %v240 = vld [vmem:[%s219 + $0x8] sm:$0xf]
        %v241 = vld [vmem:[%s219 + $0xc] sm:$0xf]
        %v242 = vld [vmem:[%s219 + $0x10] sm:$0xf]
        %v243 = vld [vmem:[%s219 + $0x14] sm:$0xf]
        %v244 = vld [vmem:[%s219 + $0x18] sm:$0xf]
        %v245 = vld [vmem:[%s219 + $0x1c] sm:$0xf]
        %v246 = vld [vmem:[%s228] sm:$0xf]
        %v247 = vld [vmem:[%s228 + $0x4] sm:$0xf]
        %v248 = vld [vmem:[%s231] sm:$0x1]
        %v250 = vperm.slane %v248, 0
        %v260 = vunpack.c.l.b16 %v238
        %v261 = vunpack.c.l.b16 %v239
        %v262 = vunpack.c.l.b16 %v240
        %v263 = vunpack.c.l.b16 %v241
        %v264 = vunpack.c.l.b16 %v242
        %v265 = vunpack.c.l.b16 %v243
        %v266 = vunpack.c.l.b16 %v244
        %v267 = vunpack.c.l.b16 %v245
        %v268 = vpack.c.b16 %v261, %v260
        %v269 = vpack.c.b16 %v263, %v262
        %v270 = vpack.c.b16 %v265, %v264
        %v271 = vpack.c.b16 %v267, %v266
        %v274 = vunpack.c.l.b16 %v246
        %v275 = vunpack.c.l.b16 %v247
        %v276 = vpack.c.b16 %v275, %v274
        %vm278 = vcmask 130048
        %v280 = vsel %vm278, %v268, 0
        %v283 = vsel %vm278, %v269, 0
        %v286 = vsel %vm278, %v270, 0
        %v289 = vsel %vm278, %v271, 0
        %291 = vmatpush.bf16.msra.mxu0 0
        %292 = vmatpush.bf16.msra.mxu0 0
        %293 = vmatpush.bf16.msra.mxu0 0
        %294 = vmatpush.bf16.msra.mxu0 0
        %295 = vmatpush.bf16.msra.mxu0 0
        %296 = vmatpush.bf16.msra.mxu0 0
        %297 = vmatpush.bf16.msra.mxu0 0
        %298 = vmatpush.bf16.msra.mxu0 %v276
        %299 = vmatmul.bf16.gmra.mxu0 %v280
        %v300 = vpop.f32.mrf.mxu0
        %v301 = vadd.f32 %v250, %v300
        %v302 = vpop.f32.mrf.mxu0
        %v303 = vadd.f32 %v250, %v302
        %304 = vmatmul.bf16.gmra.mxu0 %v283
        %v305 = vpop.f32.mrf.mxu0
        %v306 = vadd.f32 %v250, %v305
        %v307 = vpop.f32.mrf.mxu0
        %v308 = vadd.f32 %v250, %v307
        %309 = vmatmul.bf16.gmra.mxu0 %v286
        %v310 = vpop.f32.mrf.mxu0
        %v311 = vadd.f32 %v250, %v310
        %v312 = vpop.f32.mrf.mxu0
        %v313 = vadd.f32 %v250, %v312
        %314 = vmatmul.bf16.gmra.mxu0 %v289
        %v315 = vpop.f32.mrf.mxu0
        %v316 = vadd.f32 %v250, %v315
        %v317 = vpop.f32.mrf.mxu0
        %v318 = vadd.f32 %v250, %v317
        %319 = vdwg.mxu0
        %320 = vst [vmem:[%s210] sm:$0xff] %v301
        %321 = vst [vmem:[%s210 + $0x8] sm:$0xff] %v303
        %322 = vst [vmem:[%s210 + $0x10] sm:$0xff] %v306
        %323 = vst [vmem:[%s210 + $0x18] sm:$0xff] %v308
        %324 = vst [vmem:[%s210 + $0x20] sm:$0xff] %v311
        %325 = vst [vmem:[%s210 + $0x28] sm:$0xff] %v313
        %326 = vst [vmem:[%s210 + $0x30] sm:$0xff] %v316
        %327 = vst [vmem:[%s210 + $0x38] sm:$0xff] %v318
        %s328 = sand.u32 %s114, 1
        %s329 = sand.u32 %s114, 1
        %s330 = smul.addr %s329, 64
        %s331 = scalar_lea.vmem [#allocation2], %s330
        // Predicated region
        $region33: #{monkeypatch_lora_convtranspose2d.1} parent=31 // pred_check
          %p332 = pneg %p124
        $region34: #{monkeypatch_lora_convtranspose2d.1} parent=31 // pred_check_branch
          %334 = sbr.rel (%p332) target = $region36
        $region35: #{monkeypatch_lora_convtranspose2d.1} parent=31 // pred_region
          %s335 = smul.u32 8, %s19
          %s336 = ssub.s32 73, %s335
          %p337 = scmp.lt.s32.totalorder %s336, 8
          %s338 = scalar_select %p337, %s336, 8
          %s339 = smul.u32 8, %s338
          %p340 = scmp.ne.s32.totalorder 0, %s339
          %s341 = sadd.s32 %s18, %s335
          %s342 = smul.addr %s341, 8
          %s343 = scalar_lea.vmem %s3, %s342
          // Predicated region
          $region37: #{monkeypatch_lora_convtranspose2d.1} parent=35 // pred_check
            %p344 = pneg %p340
          $region38: #{monkeypatch_lora_convtranspose2d.1} parent=35 // pred_check_branch
            %346 = sbr.rel (%p344) target = $region40
          $region39: #{monkeypatch_lora_convtranspose2d.1} parent=35 // pred_region
            // Predicated region
            $region41: #{monkeypatch_lora_convtranspose2d.1} parent=39 // pred_check
              _
            $region42: #{monkeypatch_lora_convtranspose2d.1} parent=39 // pred_check_branch
              %348 = sbr.rel (0) target = $region44
            $region43: #{monkeypatch_lora_convtranspose2d.1} parent=39 // pred_region
              // Predicated region
              $region63: #{monkeypatch_lora_convtranspose2d.1} parent=43 // pred_check
                _
              $region64: #{monkeypatch_lora_convtranspose2d.1} parent=43 // pred_check_branch
                %412 = sbr.rel (0) target = $region66
              $region65: #{monkeypatch_lora_convtranspose2d.1} parent=43 // pred_region
                %s413 = sshrl.u32 %s338, 3
                // While loop
                $region67: #{monkeypatch_lora_convtranspose2d.1} parent=65 // loop_pre_header
                  _
                $region68: #{monkeypatch_lora_convtranspose2d.1} parent=65 // loop_header
                  %s415 = sphi 0, %s417
                  %p416 = scmp.ge.s32.totalorder %s415, %s413
                  %s420 = sphi 0, %s441
                  %s421 = sphi %s331, %s444
                  %s422 = sphi %s343, %s445
                $region69: #{monkeypatch_lora_convtranspose2d.1} parent=65 // loop_header_branch
                  %419 = sbr.rel (%p416) target = $region73
                $region70: #{monkeypatch_lora_convtranspose2d.1} parent=65 // loop_body
                  %v423 = vld [vmem:[%s421] sm:$0xff]
                  %424 = vst [vmem:[%s422] sm:$0xff] %v423
                  %v425 = vld [vmem:[%s421 + $0x8] sm:$0xff]
                  %426 = vst [vmem:[%s422 + $0x8] sm:$0xff] %v425
                  %v427 = vld [vmem:[%s421 + $0x10] sm:$0xff]
                  %428 = vst [vmem:[%s422 + $0x10] sm:$0xff] %v427
                  %v429 = vld [vmem:[%s421 + $0x18] sm:$0xff]
                  %430 = vst [vmem:[%s422 + $0x18] sm:$0xff] %v429
                  %v431 = vld [vmem:[%s421 + $0x20] sm:$0xff]
                  %432 = vst [vmem:[%s422 + $0x20] sm:$0xff] %v431
                  %v433 = vld [vmem:[%s421 + $0x28] sm:$0xff]
                  %434 = vst [vmem:[%s422 + $0x28] sm:$0xff] %v433
                  %v435 = vld [vmem:[%s421 + $0x30] sm:$0xff]
                  %436 = vst [vmem:[%s422 + $0x30] sm:$0xff] %v435
                  %v437 = vld [vmem:[%s421 + $0x38] sm:$0xff]
                  %438 = vst [vmem:[%s422 + $0x38] sm:$0xff] %v437
                  %s439 = sadd.s32 1, %s420
                  %p440 = scmp.ge.s32.totalorder %s439, %s413
                  %s441 = scalar_select %p440, 0, %s439
                  %s442 = smul.u32 %s441, 64
                  %s443 = smul.u32 %s441, 64
                  %s444 = scalar_lea.vmem %s331, %s442 [#allocation2]
                  %s445 = scalar_lea.vmem %s343, %s443
                $region71: #{monkeypatch_lora_convtranspose2d.1} parent=65 // loop_footer
                  %s417 = sadd.s32 %s415, 1
                $region72: #{monkeypatch_lora_convtranspose2d.1} parent=65 // loop_footer_branch
                  %414 = sbr.rel target = $region68
                $region73: #{monkeypatch_lora_convtranspose2d.1} parent=65 // loop_exit
                  _
                %s446 = sshrl.u32 %s338, 3
                %s447 = sand.u32 %s338, 7
                %s448 = smul.u32 %s446, 8
                %s449 = smul.u32 8, %s448
                %s450 = scalar_lea.vmem %s331, %s449 [#allocation2]
                %s451 = smul.u32 8, %s448
                %s452 = scalar_lea.vmem %s343, %s451
                // While loop
                $region74: #{monkeypatch_lora_convtranspose2d.1} parent=65 // loop_pre_header
                  _
                $region75: #{monkeypatch_lora_convtranspose2d.1} parent=65 // loop_header
                  %s454 = sphi 0, %s456
                  %p455 = scmp.ge.s32.totalorder %s454, %s447
                  %s459 = sphi 0, %s466
                  %s460 = sphi %s450, %s469
                  %s461 = sphi %s452, %s470
                $region76: #{monkeypatch_lora_convtranspose2d.1} parent=65 // loop_header_branch
                  %458 = sbr.rel (%p455) target = $region80
                $region77: #{monkeypatch_lora_convtranspose2d.1} parent=65 // loop_body
                  %v462 = vld [vmem:[%s460] sm:$0xff]
                  %463 = vst [vmem:[%s461] sm:$0xff] %v462
                  %s464 = sadd.s32 1, %s459
                  %p465 = scmp.ge.s32.totalorder %s464, %s447
                  %s466 = scalar_select %p465, 0, %s464
                  %s467 = smul.u32 %s466, 8
                  %s468 = smul.u32 %s466, 8
                  %s469 = scalar_lea.vmem %s450, %s467 [#allocation2]
                  %s470 = scalar_lea.vmem %s452, %s468
                $region78: #{monkeypatch_lora_convtranspose2d.1} parent=65 // loop_footer
                  %s456 = sadd.s32 %s454, 1
                $region79: #{monkeypatch_lora_convtranspose2d.1} parent=65 // loop_footer_branch
                  %453 = sbr.rel target = $region75
                $region80: #{monkeypatch_lora_convtranspose2d.1} parent=65 // loop_exit
                  _
              $region66: #{monkeypatch_lora_convtranspose2d.1} parent=43 // pred_fallthru
                _
              // Predicated region
              $region81: #{monkeypatch_lora_convtranspose2d.1} parent=43 // pred_check
                _
              $region82: #{monkeypatch_lora_convtranspose2d.1} parent=43 // pred_check_branch
                %472 = sbr.rel target = $region84
              $region83: #{monkeypatch_lora_convtranspose2d.1} parent=43 // pred_region
                _
              $region84: #{monkeypatch_lora_convtranspose2d.1} parent=43 // pred_fallthru
                _
            $region44: #{monkeypatch_lora_convtranspose2d.1} parent=39 // pred_fallthru
              _
            // Predicated region
            $region45: #{monkeypatch_lora_convtranspose2d.1} parent=39 // pred_check
              _
            $region46: #{monkeypatch_lora_convtranspose2d.1} parent=39 // pred_check_branch
              %350 = sbr.rel target = $region48
            $region47: #{monkeypatch_lora_convtranspose2d.1} parent=39 // pred_region
              %s352 = ssub.s32 256, 1
              %s353 = sshrl.u32 %s338, 3
              // While loop
              $region49: #{monkeypatch_lora_convtranspose2d.1} parent=47 // loop_pre_header
                _
              $region50: #{monkeypatch_lora_convtranspose2d.1} parent=47 // loop_header
                %s355 = sphi 0, %s357
                %p356 = scmp.ge.s32.totalorder %s355, %s353
                %s360 = sphi 0, %s381
                %s361 = sphi %s331, %s384
                %s362 = sphi %s343, %s385
              $region51: #{monkeypatch_lora_convtranspose2d.1} parent=47 // loop_header_branch
                %359 = sbr.rel (%p356) target = $region55
              $region52: #{monkeypatch_lora_convtranspose2d.1} parent=47 // loop_body
                %v363 = vld [vmem:[%s361] sm:%s352]
                %364 = vst [vmem:[%s362] sm:%s352] %v363
                %v365 = vld [vmem:[%s361 + $0x8] sm:%s352]
                %366 = vst [vmem:[%s362 + $0x8] sm:%s352] %v365
                %v367 = vld [vmem:[%s361 + $0x10] sm:%s352]
                %368 = vst [vmem:[%s362 + $0x10] sm:%s352] %v367
                %v369 = vld [vmem:[%s361 + $0x18] sm:%s352]
                %370 = vst [vmem:[%s362 + $0x18] sm:%s352] %v369
                %v371 = vld [vmem:[%s361 + $0x20] sm:%s352]
                %372 = vst [vmem:[%s362 + $0x20] sm:%s352] %v371
                %v373 = vld [vmem:[%s361 + $0x28] sm:%s352]
                %374 = vst [vmem:[%s362 + $0x28] sm:%s352] %v373
                %v375 = vld [vmem:[%s361 + $0x30] sm:%s352]
                %376 = vst [vmem:[%s362 + $0x30] sm:%s352] %v375
                %v377 = vld [vmem:[%s361 + $0x38] sm:%s352]
                %378 = vst [vmem:[%s362 + $0x38] sm:%s352] %v377
                %s379 = sadd.s32 1, %s360
                %p380 = scmp.ge.s32.totalorder %s379, %s353
                %s381 = scalar_select %p380, 0, %s379
                %s382 = smul.u32 %s381, 64
                %s383 = smul.u32 %s381, 64
                %s384 = scalar_lea.vmem %s331, %s382 [#allocation2]
                %s385 = scalar_lea.vmem %s343, %s383
              $region53: #{monkeypatch_lora_convtranspose2d.1} parent=47 // loop_footer
                %s357 = sadd.s32 %s355, 1
              $region54: #{monkeypatch_lora_convtranspose2d.1} parent=47 // loop_footer_branch
                %354 = sbr.rel target = $region50
              $region55: #{monkeypatch_lora_convtranspose2d.1} parent=47 // loop_exit
                _
              %s386 = sshrl.u32 %s338, 3
              %s387 = sand.u32 %s338, 7
              %s388 = smul.u32 %s386, 8
              %s389 = smul.u32 8, %s388
              %s390 = scalar_lea.vmem %s331, %s389 [#allocation2]
              %s391 = smul.u32 8, %s388
              %s392 = scalar_lea.vmem %s343, %s391
              // While loop
              $region56: #{monkeypatch_lora_convtranspose2d.1} parent=47 // loop_pre_header
                _
              $region57: #{monkeypatch_lora_convtranspose2d.1} parent=47 // loop_header
                %s394 = sphi 0, %s396
                %p395 = scmp.ge.s32.totalorder %s394, %s387
                %s399 = sphi 0, %s406
                %s400 = sphi %s390, %s409
                %s401 = sphi %s392, %s410
              $region58: #{monkeypatch_lora_convtranspose2d.1} parent=47 // loop_header_branch
                %398 = sbr.rel (%p395) target = $region62
              $region59: #{monkeypatch_lora_convtranspose2d.1} parent=47 // loop_body
                %v402 = vld [vmem:[%s400] sm:%s352]
                %403 = vst [vmem:[%s401] sm:%s352] %v402
                %s404 = sadd.s32 1, %s399
                %p405 = scmp.ge.s32.totalorder %s404, %s387
                %s406 = scalar_select %p405, 0, %s404
                %s407 = smul.u32 %s406, 8
                %s408 = smul.u32 %s406, 8
                %s409 = scalar_lea.vmem %s390, %s407 [#allocation2]
                %s410 = scalar_lea.vmem %s392, %s408
              $region60: #{monkeypatch_lora_convtranspose2d.1} parent=47 // loop_footer
                %s396 = sadd.s32 %s394, 1
              $region61: #{monkeypatch_lora_convtranspose2d.1} parent=47 // loop_footer_branch
                %393 = sbr.rel target = $region57
              $region62: #{monkeypatch_lora_convtranspose2d.1} parent=47 // loop_exit
                _
            $region48: #{monkeypatch_lora_convtranspose2d.1} parent=39 // pred_fallthru
              _
          $region40: #{monkeypatch_lora_convtranspose2d.1} parent=35 // pred_fallthru
            _
          %473 = vnop
        $region36: #{monkeypatch_lora_convtranspose2d.1} parent=31 // pred_fallthru
          _
      $region32: #{monkeypatch_lora_convtranspose2d.1} parent=5 // pred_fallthru
        _
      %p474 = scmp.le.s32.totalorder 2, %s9
      // Predicated region
      $region85: #{monkeypatch_lora_convtranspose2d.1} parent=5 // pred_check
        %p475 = pneg %p474
      $region86: #{monkeypatch_lora_convtranspose2d.1} parent=5 // pred_check_branch
        %477 = sbr.rel (%p475) target = $region88
      $region87: #{monkeypatch_lora_convtranspose2d.1} parent=5 // pred_region
        %s478 = ssub.s32 %s9, 2
        // Predicated region
        $region89: #{monkeypatch_lora_convtranspose2d.1} parent=87 // pred_check
          %p479 = pneg %p130
        $region90: #{monkeypatch_lora_convtranspose2d.1} parent=87 // pred_check_branch
          %481 = sbr.rel (%p479) target = $region92
        $region91: #{monkeypatch_lora_convtranspose2d.1} parent=87 // pred_region
          %s482 = sand.u32 %s115, 1
          %s483 = sand.u32 %s115, 1
          %s484 = smul.addr %s483, 64
          %s485 = scalar_lea.vmem [#allocation2], %s484
        $region92: #{monkeypatch_lora_convtranspose2d.1} parent=87 // pred_fallthru
          _
      $region88: #{monkeypatch_lora_convtranspose2d.1} parent=5 // pred_fallthru
        _
    $region6: #{monkeypatch_lora_convtranspose2d.1} parent=1 // loop_footer
      %s13 = sadd.s32 1, %s9
    $region7: #{monkeypatch_lora_convtranspose2d.1} parent=1 // loop_footer_branch
      %8 = sbr.rel target = $region3
    $region8: #{monkeypatch_lora_convtranspose2d.1} parent=1 // loop_exit
      _

</llo_original>
